<compile_context>
chip_gen: v7x
topology: tpu7x:2x2x1
jax: 0.10.0
libtpu: 0.0.40
codegen_flags: <defaults>
</compile_context>

<pallas_src>
import functools

import jax
import jax.numpy as jnp
import numpy as np
from jax.experimental import pallas as pl
from jax.experimental.pallas import tpu as pltpu


# ----------------------------------------------------------------------------
# __init__ logic (pure Python, no parameters/weights in this module)
# ----------------------------------------------------------------------------
def normalize_rs(Rs):
    out = []
    for r in Rs:
        if len(r) == 2:
            mul, l = r
            p = 0
        else:
            mul, l, p = r
        if mul == 0:
            continue
        out.append((mul, l, p))
    return out


def align_rs(Rs_1, Rs_2):
    """Replicates ElementwiseMultiplication.__init__ multiplicity alignment."""
    Rs_1 = [list(r) for r in normalize_rs(Rs_1)]
    Rs_2 = [list(r) for r in normalize_rs(Rs_2)]
    assert sum(m for m, _, _ in Rs_1) == sum(m for m, _, _ in Rs_2)
    i = 0
    while i < len(Rs_1):
        mul_1, l_1, p_1 = Rs_1[i]
        mul_2, l_2, p_2 = Rs_2[i]
        if mul_1 < mul_2:
            Rs_2[i] = [mul_1, l_2, p_2]
            Rs_2.insert(i + 1, [mul_2 - mul_1, l_2, p_2])
        if mul_2 < mul_1:
            Rs_1[i] = [mul_2, l_1, p_1]
            Rs_1.insert(i + 1, [mul_1 - mul_2, l_1, p_1])
        i += 1
    Rs_1 = tuple(tuple(r) for r in Rs_1)
    Rs_2 = tuple(tuple(r) for r in Rs_2)
    Rs_out = []
    for (mul, l_1, p_1), (mul2, l_2, p_2) in zip(Rs_1, Rs_2):
        assert mul == mul2
        for l in range(abs(l_1 - l_2), l_1 + l_2 + 1):
            Rs_out.append((mul, l, p_1 * p_2))
    return Rs_1, Rs_2, tuple(Rs_out)


def rs_dim(Rs):
    return sum(mul * (2 * l + 1) for mul, l, _ in Rs)


# ----------------------------------------------------------------------------
# Pallas kernel: channels-first, per-irrep-block broadcasted multiply
# ----------------------------------------------------------------------------
def _elemwise_mul_kernel(f1_ref, f2_ref, o_ref, *, Rs_1, Rs_2):
    # Refs are channels-first: f1 (n_1, tile_b), f2 (n_2, tile_b),
    # o (n_out, tile_b).  The batch tile occupies the full 128-lane axis;
    # irrep blocks are static sublane-row slices written directly to o_ref.
    i1 = 0
    i2 = 0
    io = 0
    for (mul, l1, _), (_, l2, _) in zip(Rs_1, Rs_2):
        d1 = 2 * l1 + 1
        d2 = 2 * l2 + 1
        d_out = 2 * max(l1, l2) + 1
        if l1 != 0 and l2 != 0:
            # TODO(synk): Clebsch-Gordan contraction for l1>0 and l2>0 is not
            # needed for the configured Rs and is not implemented here.
            raise NotImplementedError("CG path (l1>0 and l2>0) not supported")
        if d1 == 1 and d2 == 1:
            # Scalar x scalar: the whole multiplicity block in one multiply.
            o_ref[io:io + mul, :] = f1_ref[i1:i1 + mul, :] * f2_ref[i2:i2 + mul, :]
        elif d1 == 1:
            # Scalar x vector: broadcast the single f1 row over d2 f2 rows.
            for m in range(mul):
                a = f1_ref[i1 + m:i1 + m + 1, :]              # (1, tile_b)
                b = f2_ref[i2 + m * d2:i2 + (m + 1) * d2, :]  # (d2, tile_b)
                o_ref[io + m * d2:io + (m + 1) * d2, :] = a * b
        else:  # d2 == 1
            # Vector x scalar: broadcast the single f2 row over d1 f1 rows.
            for m in range(mul):
                a = f1_ref[i1 + m * d1:i1 + (m + 1) * d1, :]  # (d1, tile_b)
                b = f2_ref[i2 + m:i2 + m + 1, :]              # (1, tile_b)
                o_ref[io + m * d1:io + (m + 1) * d1, :] = a * b
        i1 += mul * d1
        i2 += mul * d2
        io += mul * d_out


def elementwise_multiplication(features_1, features_2, Rs_1, Rs_2, Rs_out,
                               tile_b=1024):
    """features_*: [..., channels] (channels-last, as in the torch module)."""
    assert tile_b % 128 == 0, "tile_b must be a multiple of the 128-lane width"
    *size_1, n_1 = features_1.shape
    *size_2, n_2 = features_2.shape
    assert list(size_1) == list(size_2)
    assert n_1 == rs_dim(Rs_1) and n_2 == rs_dim(Rs_2)
    n_out = rs_dim(Rs_out)
    out_dtype = jnp.result_type(features_1.dtype, features_2.dtype)

    # Channels-first so the flattened batch lands on the lane axis.
    f1 = features_1.reshape(-1, n_1).astype(out_dtype).T   # (n_1, batch)
    f2 = features_2.reshape(-1, n_2).astype(out_dtype).T   # (n_2, batch)
    batch = f1.shape[1]

    # Pad the lane (batch) axis to a multiple of tile_b; padding is zeros and
    # is sliced off after the call, so no divisibility requirement on batch.
    padded = pl.cdiv(batch, tile_b) * tile_b
    if padded != batch:
        f1 = jnp.pad(f1, ((0, 0), (0, padded - batch)))
        f2 = jnp.pad(f2, ((0, 0), (0, padded - batch)))

    elem_bytes = jnp.dtype(out_dtype).itemsize
    cost = pl.CostEstimate(
        flops=batch * n_out,
        transcendentals=0,
        bytes_accessed=batch * (n_1 + n_2 + n_out) * elem_bytes,
    )

    kernel = functools.partial(_elemwise_mul_kernel, Rs_1=Rs_1, Rs_2=Rs_2)
    out = pl.pallas_call(
        kernel,
        out_shape=jax.ShapeDtypeStruct((n_out, padded), out_dtype),
        grid_spec=pltpu.PrefetchScalarGridSpec(
            num_scalar_prefetch=0,
            grid=(padded // tile_b,),
            in_specs=[
                pl.BlockSpec((n_1, tile_b), lambda i: (0, i)),
                pl.BlockSpec((n_2, tile_b), lambda i: (0, i)),
            ],
            out_specs=pl.BlockSpec((n_out, tile_b), lambda i: (0, i)),
        ),
        compiler_params=pltpu.CompilerParams(
            dimension_semantics=("parallel",)),
        cost_estimate=cost,
    )(f1, f2)

    out = out[:, :batch].T          # back to (batch, n_out), channels-last
    return out.reshape(*size_1, n_out)


# ----------------------------------------------------------------------------
# Pure-JAX reference (same semantics as the torch forward, scalar-pair case)
# ----------------------------------------------------------------------------
def reference(features_1, features_2, Rs_1, Rs_2):
    *size, n_1 = features_1.shape
    f1 = features_1.reshape(-1, n_1)
    f2 = features_2.reshape(-1, features_2.shape[-1])
    batch = f1.shape[0]
    outs = []
    i1 = i2 = 0
    for (mul, l1, _), (_, l2, _) in zip(Rs_1, Rs_2):
        d1 = 2 * l1 + 1
        d2 = 2 * l2 + 1
        a = f1[:, i1:i1 + mul * d1].reshape(batch * mul, d1)
        b = f2[:, i2:i2 + mul * d2].reshape(batch * mul, d2)
        i1 += mul * d1
        i2 += mul * d2
        assert l1 == 0 or l2 == 0
        outs.append((a * b).reshape(batch, mul * (2 * max(l1, l2) + 1)))
    out = jnp.concatenate(outs, axis=1)
    return out.reshape(*size, -1)


if __name__ == "__main__":
    # Module config from the docstring example.
    Rs_1_in = [(2, 0), (1, 1)]
    Rs_2_in = [(1, 1), (2, 0)]
    Rs_1, Rs_2, Rs_out = align_rs(Rs_1_in, Rs_2_in)
    n_1 = rs_dim(Rs_1)      # 5
    n_2 = rs_dim(Rs_2)      # 5
    n_out = rs_dim(Rs_out)  # 7

    key = jax.random.PRNGKey(0)
    k1, k2 = jax.random.split(key)
    # features: [..., channels]; flattened batch = 2 * 100 = 200 (not a
    # multiple of the tile -> exercises the padded final block), and with
    # tile_b=128 the grid has 2 parallel steps.
    features_1 = jax.random.normal(k1, (2, 100, n_1), dtype=jnp.float32)
    features_2 = jax.random.normal(k2, (2, 100, n_2), dtype=jnp.float32)

    out = elementwise_multiplication(features_1, features_2,
                                     Rs_1, Rs_2, Rs_out, tile_b=128)
    out = jax.block_until_ready(out)

    ref = reference(features_1, features_2, Rs_1, Rs_2)
    assert out.shape == (2, 100, n_out), out.shape
    np.testing.assert_allclose(np.asarray(out), np.asarray(ref),
                               rtol=1e-6, atol=1e-6)
    print("KERNEL_OK")
</pallas_src>

<mosaic_0001>
module attributes {stable_mosaic.version = 11 : i64} {
  func.func @_elemwise_mul_kernel(%arg0: i32, %arg1: memref<5x128xf32, #tpu.memory_space<vmem>>, %arg2: memref<5x128xf32, #tpu.memory_space<vmem>>, %arg3: memref<7x128xf32, #tpu.memory_space<vmem>>) attributes {dimension_semantics = [#tpu.dimension_semantics<parallel>], iteration_bounds = array<i64: 2>, scalar_prefetch = 0 : i64, scratch_operands = 0 : i64, tpu.core_type = #tpu.core_type<tc>, window_params = [{transform_indices = @transform_0, window_bounds = array<i64: 5, 128>}, {transform_indices = @transform_1, window_bounds = array<i64: 5, 128>}, {transform_indices = @transform_2, window_bounds = array<i64: 7, 128>}]} {
    %c0 = arith.constant 0 : index
    %c0_0 = arith.constant 0 : index
    %0 = vector.load %arg1[%c0, %c0_0] : memref<5x128xf32, #tpu.memory_space<vmem>>, vector<1x128xf32>
    %c0_1 = arith.constant 0 : index
    %c0_2 = arith.constant 0 : index
    %1 = vector.load %arg2[%c0_1, %c0_2] : memref<5x128xf32, #tpu.memory_space<vmem>>, vector<3x128xf32>
    %2 = vector.broadcast %0 : vector<1x128xf32> to vector<3x128xf32>
    %3 = arith.mulf %2, %1 : vector<3x128xf32>
    %c0_3 = arith.constant 0 : index
    %c0_4 = arith.constant 0 : index
    %4 = vector.load %arg3[%c0_3, %c0_4] : memref<7x128xf32, #tpu.memory_space<vmem>>, vector<3x128xf32>
    tpu.vector_store %arg3[%c0_3, %c0_4], %3 {strides = array<i32>} : memref<7x128xf32, #tpu.memory_space<vmem>>, vector<3x128xf32>,
    %c1 = arith.constant 1 : index
    %c0_5 = arith.constant 0 : index
    %5 = vector.load %arg1[%c1, %c0_5] : memref<5x128xf32, #tpu.memory_space<vmem>>, vector<1x128xf32>
    %c3 = arith.constant 3 : index
    %c0_6 = arith.constant 0 : index
    %6 = vector.load %arg2[%c3, %c0_6] : memref<5x128xf32, #tpu.memory_space<vmem>>, vector<1x128xf32>
    %7 = arith.mulf %5, %6 : vector<1x128xf32>
    %c3_7 = arith.constant 3 : index
    %c0_8 = arith.constant 0 : index
    %8 = vector.load %arg3[%c3_7, %c0_8] : memref<7x128xf32, #tpu.memory_space<vmem>>, vector<1x128xf32>
    tpu.vector_store %arg3[%c3_7, %c0_8], %7 {strides = array<i32>} : memref<7x128xf32, #tpu.memory_space<vmem>>, vector<1x128xf32>,
    %c2 = arith.constant 2 : index
    %c0_9 = arith.constant 0 : index
    %9 = vector.load %arg1[%c2, %c0_9] : memref<5x128xf32, #tpu.memory_space<vmem>>, vector<3x128xf32>
    %c4 = arith.constant 4 : index
    %c0_10 = arith.constant 0 : index
    %10 = vector.load %arg2[%c4, %c0_10] : memref<5x128xf32, #tpu.memory_space<vmem>>, vector<1x128xf32>
    %11 = vector.broadcast %10 : vector<1x128xf32> to vector<3x128xf32>
    %12 = arith.mulf %9, %11 : vector<3x128xf32>
    %c4_11 = arith.constant 4 : index
    %c0_12 = arith.constant 0 : index
    %13 = vector.load %arg3[%c4_11, %c0_12] : memref<7x128xf32, #tpu.memory_space<vmem>>, vector<3x128xf32>
    tpu.vector_store %arg3[%c4_11, %c0_12], %12 {strides = array<i32>} : memref<7x128xf32, #tpu.memory_space<vmem>>, vector<3x128xf32>,
    return
  }
  func.func @transform_0(%arg0: i32) -> (i32, i32) {
    %c0_i32 = arith.constant 0 : i32
    %c0_i32_0 = arith.constant 0 : i32
    return %c0_i32, %arg0 : i32, i32
  }
  func.func @transform_1(%arg0: i32) -> (i32, i32) {
    %c0_i32 = arith.constant 0 : i32
    %c0_i32_0 = arith.constant 0 : i32
    return %c0_i32, %arg0 : i32, i32
  }
  func.func @transform_2(%arg0: i32) -> (i32, i32) {
    %c0_i32 = arith.constant 0 : i32
    %c0_i32_0 = arith.constant 0 : i32
    return %c0_i32, %arg0 : i32, i32
  }
}

</mosaic_0001>

<llo_original>
// kernel: tpu_custom_call.1
$region0: #{tpu_custom_call.1}
  #allocation0 [shape = 'u32[]', space=smem, size = 0x4, offset = 0x4, fixed_abs, tag = 'smem constant byte address 0x4 - core index']
  #allocation1 [shape = 'u32[144,128]{1,0:T(1,128)}', space=vmem, size = 0x12000, scoped, tag = 'internal scratch']
  %s0 = inlined_call_operand.hbm [shape: f32[5,256], index: 0, kind: input, shape index: {}]
  %s1 = inlined_call_operand.hbm [shape: f32[5,256], index: 1, kind: input, shape index: {}]
  %s2 = inlined_call_operand.hbm [shape: f32[7,256], index: 2, kind: output, shape index: {}]
  %s3 = sld [smem:[#allocation0]]
  $region49: #{tpu_custom_call.1} parent=0
    _
  %s5 = ssub.s32 1, %s3
  %s6 = scalar_select 0, %s5, %s3
  $region1: #{tpu_custom_call.1} parent=0
    #allocation2 [shape = 'u8[8192]{0}', space=vmem, size = 0x2000, scoped, tag = 'input window, operand 0']
    #allocation3 [shape = 's32[2]{0}', space=sflag, size = 0x8, scoped, tag = 'scoped memory for tpu_custom_call.1']
    #allocation4 [shape = 's32[2]{0}', space=sflag, size = 0x8, scoped, tag = 'scoped memory for tpu_custom_call.1']
    #allocation5 [shape = 'u8[8192]{0}', space=vmem, size = 0x2000, scoped, tag = 'input window, operand 1']
    #allocation6 [shape = 's32[2]{0}', space=sflag, size = 0x8, scoped, tag = 'scoped memory for tpu_custom_call.1']
    #allocation7 [shape = 'u8[8192]{0}', space=vmem, size = 0x2000, scoped, tag = 'output window, operand 0']
    %7 = vsyncpa [#allocation3], 0
    %s8 = scalar_lea.sflag [#allocation3], 1
    %9 = vsyncpa %s8, 0
    %10 = vsyncpa [#allocation6], 0
    %s11 = scalar_lea.sflag [#allocation6], 1
    %12 = vsyncpa %s11, 0
    %13 = vsyncpa [#allocation4], 0
    %s14 = scalar_lea.sflag [#allocation4], 1
    %15 = vsyncpa %s14, 0
    loop: start=0, step=1, limit=4
    $region2: #{tpu_custom_call.1} parent=1 // loop_pre_header
      _
    $region3: #{tpu_custom_call.1} parent=1 // loop_header
      %s17 = sphi 0, %s21
      %p18 = scmp.ge.s32.totalorder %s17, 4
      %s27 = sphi 0, %s29
      %s30 = sphi 0, %s27
      %s31 = sphi 0, %s30
      %s47 = sphi 0, %s31
      %s53 = sphi 0, %s55
      %s56 = sphi 0, %s53
      %s57 = sphi 0, %s56
      %s73 = sphi 0, %s57
      %s79 = sphi 0, %s81
      %s82 = sphi 0, %s79
      %s83 = sphi 0, %s82
      %s99 = sphi 0, %s83
    $region4: #{tpu_custom_call.1} parent=1 // loop_header_branch
      %20 = sbr.rel (%p18) target = $region8
    $region5: #{tpu_custom_call.1} parent=1 // loop_body
      %s22 = ssub.s32 %s17, 1
      %s23 = ssub.s32 %s17, 2
      %s24 = sadd.s32 %s17, 1
      %s25 = ssub.s32 %s17, %s24
      %p26 = scmp.eq.s32.totalorder %s25, 0
      %s28 = sadd.s32 %s27, 1
      %s29 = scalar_select %p26, %s27, %s28
      %p32 = pneg %p26
      %p33 = scmp.eq.s32.totalorder %s17, 1
      %p34 = por %p32, %p33
      %p35 = scmp.ne.s32.totalorder %s27, %s30
      %p36 = scmp.eq.s32.totalorder %s17, 0
      %p37 = por %p35, %p36
      %p38 = scmp.ne.s32.totalorder %s27, %s30
      %p39 = scmp.eq.s32.totalorder %s22, 1
      %p40 = por %p38, %p39
      %p41 = scmp.ne.s32.totalorder %s30, %s31
      %p42 = scmp.eq.s32.totalorder %s22, 0
      %p43 = por %p41, %p42
      %p44 = scmp.ne.s32.totalorder %s30, %s31
      %p45 = scmp.eq.s32.totalorder %s23, 1
      %p46 = por %p44, %p45
      %p48 = scmp.ne.s32.totalorder %s31, %s47
      %p49 = scmp.eq.s32.totalorder %s23, 0
      %p50 = por %p48, %p49
      %s51 = ssub.s32 %s17, %s24
      %p52 = scmp.eq.s32.totalorder %s51, 0
      %s54 = sadd.s32 %s53, 1
      %s55 = scalar_select %p52, %s53, %s54
      %p58 = pneg %p52
      %p59 = scmp.eq.s32.totalorder %s17, 1
      %p60 = por %p58, %p59
      %p61 = scmp.ne.s32.totalorder %s53, %s56
      %p62 = scmp.eq.s32.totalorder %s17, 0
      %p63 = por %p61, %p62
      %p64 = scmp.ne.s32.totalorder %s53, %s56
      %p65 = scmp.eq.s32.totalorder %s22, 1
      %p66 = por %p64, %p65
      %p67 = scmp.ne.s32.totalorder %s56, %s57
      %p68 = scmp.eq.s32.totalorder %s22, 0
      %p69 = por %p67, %p68
      %p70 = scmp.ne.s32.totalorder %s56, %s57
      %p71 = scmp.eq.s32.totalorder %s23, 1
      %p72 = por %p70, %p71
      %p74 = scmp.ne.s32.totalorder %s57, %s73
      %p75 = scmp.eq.s32.totalorder %s23, 0
      %p76 = por %p74, %p75
      %s77 = ssub.s32 %s17, %s24
      %p78 = scmp.eq.s32.totalorder %s77, 0
      %s80 = sadd.s32 %s79, 1
      %s81 = scalar_select %p78, %s79, %s80
      %p84 = pneg %p78
      %p85 = scmp.eq.s32.totalorder %s17, 1
      %p86 = por %p84, %p85
      %p87 = scmp.ne.s32.totalorder %s79, %s82
      %p88 = scmp.eq.s32.totalorder %s17, 0
      %p89 = por %p87, %p88
      %p90 = scmp.ne.s32.totalorder %s79, %s82
      %p91 = scmp.eq.s32.totalorder %s22, 1
      %p92 = por %p90, %p91
      %p93 = scmp.ne.s32.totalorder %s82, %s83
      %p94 = scmp.eq.s32.totalorder %s22, 0
      %p95 = por %p93, %p94
      %p96 = scmp.ne.s32.totalorder %s82, %s83
      %p97 = scmp.eq.s32.totalorder %s23, 1
      %p98 = por %p96, %p97
      %p100 = scmp.ne.s32.totalorder %s83, %s99
      %p101 = scmp.eq.s32.totalorder %s23, 0
      %p102 = por %p100, %p101
      %p103 = scmp.le.s32.totalorder 1, %s17
      %p104 = scmp.lt.s32.totalorder %s17, 3
      %p105 = pnand %p103, %p104
      %p106 = pneg %p105
      // Predicated region
      $region9: #{tpu_custom_call.1} parent=5 // pred_check
        _
      $region10: #{tpu_custom_call.1} parent=5 // pred_check_branch
        %108 = sbr.rel (%p105) target = $region12
      $region11: #{tpu_custom_call.1} parent=5 // pred_region
        %s109 = ssub.s32 %s17, 1
      $region12: #{tpu_custom_call.1} parent=5 // pred_fallthru
        _
      %p110 = scmp.lt.s32.totalorder %s17, 2
      // Predicated region
      $region13: #{tpu_custom_call.1} parent=5 // pred_check
        %p111 = pneg %p110
      $region14: #{tpu_custom_call.1} parent=5 // pred_check_branch
        %113 = sbr.rel (%p111) target = $region16
      $region15: #{tpu_custom_call.1} parent=5 // pred_region
        // Predicated region
        $region17: #{tpu_custom_call.1} parent=15 // pred_check
          %p114 = pneg %p37
        $region18: #{tpu_custom_call.1} parent=15 // pred_check_branch
          %116 = sbr.rel (%p114) target = $region20
        $region19: #{tpu_custom_call.1} parent=15 // pred_region
          %s117 = sand.u32 %s27, 1
          %s118 = scalar_lea.sflag [#allocation3], %s117
          %s119 = sand.u32 %s27, 1
          %s120 = smul.addr %s119, 8
          %s121 = scalar_lea.vmem [#allocation2], %s120
          %s123 = ssub.s32 128, 128
          %124 = vsyncadd %s118, %s123
          %s125 = smul.addr %s17, 128
          %s126 = scalar_lea.hbm %s0, %s125
          %s128 = sshll.u32 %s121, 4
          %s129 = int_to_ptr.vmem [resolvable:$true] %s128
          %131 = dma.hbm_to_vmem [thread:$0]  %s126, 128, %s129, %s118
        $region20: #{tpu_custom_call.1} parent=15 // pred_fallthru
          _
        // Predicated region
        $region21: #{tpu_custom_call.1} parent=15 // pred_check
          %p132 = pneg %p63
        $region22: #{tpu_custom_call.1} parent=15 // pred_check_branch
          %134 = sbr.rel (%p132) target = $region24
        $region23: #{tpu_custom_call.1} parent=15 // pred_region
          %s135 = sand.u32 %s53, 1
          %s136 = scalar_lea.sflag [#allocation6], %s135
          %s137 = sand.u32 %s53, 1
          %s138 = smul.addr %s137, 8
          %s139 = scalar_lea.vmem [#allocation5], %s138
          %s141 = ssub.s32 128, 128
          %142 = vsyncadd %s136, %s141
          %s143 = smul.addr %s17, 128
          %s144 = scalar_lea.hbm %s1, %s143
          %s146 = sshll.u32 %s139, 4
          %s147 = int_to_ptr.vmem [resolvable:$true] %s146
          %149 = dma.hbm_to_vmem [thread:$0]  %s144, 128, %s147, %s136
        $region24: #{tpu_custom_call.1} parent=15 // pred_fallthru
          _
      $region16: #{tpu_custom_call.1} parent=5 // pred_fallthru
        _
      %p150 = scmp.le.s32.totalorder 1, %s17
      %p151 = scmp.lt.s32.totalorder %s17, 3
      %p152 = pnand %p150, %p151
      %p153 = pneg %p152
      // Predicated region
      $region25: #{tpu_custom_call.1} parent=5 // pred_check
        _
      $region26: #{tpu_custom_call.1} parent=5 // pred_check_branch
        %155 = sbr.rel (%p152) target = $region28
      $region27: #{tpu_custom_call.1} parent=5 // pred_region
        %s156 = ssub.s32 %s17, 1
        %s157 = sand.u32 %s30, 1
        %s158 = scalar_lea.sflag [#allocation3], %s157
        %s159 = sand.u32 %s30, 1
        %s160 = smul.addr %s159, 8
        %s161 = scalar_lea.vmem [#allocation2], %s160
        // Predicated region
        $region29: #{tpu_custom_call.1} parent=27 // pred_check
          %p162 = pneg %p43
        $region30: #{tpu_custom_call.1} parent=27 // pred_check_branch
          %164 = sbr.rel (%p162) target = $region32
        $region31: #{tpu_custom_call.1} parent=27 // pred_region
          %165 = dma.done %s158, 128
        $region32: #{tpu_custom_call.1} parent=27 // pred_fallthru
          _
        %s166 = sand.u32 %s56, 1
        %s167 = scalar_lea.sflag [#allocation6], %s166
        %s168 = sand.u32 %s56, 1
        %s169 = smul.addr %s168, 8
        %s170 = scalar_lea.vmem [#allocation5], %s169
        // Predicated region
        $region33: #{tpu_custom_call.1} parent=27 // pred_check
          %p171 = pneg %p69
        $region34: #{tpu_custom_call.1} parent=27 // pred_check_branch
          %173 = sbr.rel (%p171) target = $region36
        $region35: #{tpu_custom_call.1} parent=27 // pred_region
          %174 = dma.done %s167, 128
        $region36: #{tpu_custom_call.1} parent=27 // pred_fallthru
          _
        %s175 = sand.u32 %s30, 1
        %s176 = scalar_lea.sflag [#allocation3], %s175
        %s177 = sand.u32 %s30, 1
        %s178 = smul.addr %s177, 8
        %s179 = scalar_lea.vmem [#allocation2], %s178
        %p180 = pneg %p43
        %p181 = pneg %p40
        %s182 = sand.u32 %s56, 1
        %s183 = scalar_lea.sflag [#allocation6], %s182
        %s184 = sand.u32 %s56, 1
        %s185 = smul.addr %s184, 8
        %s186 = scalar_lea.vmem [#allocation5], %s185
        %p187 = pneg %p69
        %p188 = pneg %p66
        %p189 = pneg %p95
        %p190 = pneg %p92
        %s191 = sand.u32 %s82, 1
        %s192 = scalar_lea.sflag [#allocation4], %s191
        %s193 = sand.u32 %s82, 1
        %s194 = smul.addr %s193, 8
        %s195 = scalar_lea.vmem [#allocation7], %s194
        %v196 = vld [vmem:[%s161] sm:$0x1]
        %v197 = vld [vmem:[%s170] sm:$0x7]
        %v198 = vlaneseq
        %v199 = vshrl.u32 %v198, 7
        %v200 = vsub.s32 0, %v199
        %v201 = vrot.slane %v196, %v200
        %v202 = vmul.f32 %v201, %v197
        %203 = vst [vmem:[%s195] sm:$0x7] %v202
        %v204 = vld [vmem:[%s161 + $0x1] sm:$0x1]
        %v205 = vld [vmem:[%s170 + $0x3] sm:$0x1]
        %v206 = vmul.f32 %v204, %v205
        %207 = vst [vmem:[%s195 + $0x3] sm:$0x1] %v206
        %v208 = vld [vmem:[%s161 + $0x2] sm:$0x7]
        %v209 = vld [vmem:[%s170 + $0x4] sm:$0x1]
        %v210 = vlaneseq
        %v211 = vshrl.u32 %v210, 7
        %v212 = vsub.s32 0, %v211
        %v213 = vrot.slane %v209, %v212
        %v214 = vmul.f32 %v208, %v213
        %215 = vst [vmem:[%s195 + $0x4] sm:$0x7] %v214
        %s216 = sand.u32 %s82, 1
        %s217 = scalar_lea.sflag [#allocation4], %s216
        %s218 = sand.u32 %s82, 1
        %s219 = smul.addr %s218, 8
        %s220 = scalar_lea.vmem [#allocation7], %s219
        // Predicated region
        $region37: #{tpu_custom_call.1} parent=27 // pred_check
          %p221 = pneg %p92
        $region38: #{tpu_custom_call.1} parent=27 // pred_check_branch
          %223 = sbr.rel (%p221) target = $region40
        $region39: #{tpu_custom_call.1} parent=27 // pred_region
          %s225 = ssub.s32 128, 128
          %226 = vsyncadd %s217, %s225
          %s227 = smul.addr %s22, 128
          %s228 = scalar_lea.hbm %s2, %s227
          %s230 = sshll.u32 %s220, 4
          %s231 = int_to_ptr.vmem [resolvable:$true] %s230
          %233 = dma.vmem_to_hbm [thread:$0]  %s231, 128, %s228, %s217
        $region40: #{tpu_custom_call.1} parent=27 // pred_fallthru
          _
      $region28: #{tpu_custom_call.1} parent=5 // pred_fallthru
        _
      %p234 = scmp.le.s32.totalorder 2, %s17
      // Predicated region
      $region41: #{tpu_custom_call.1} parent=5 // pred_check
        %p235 = pneg %p234
      $region42: #{tpu_custom_call.1} parent=5 // pred_check_branch
        %237 = sbr.rel (%p235) target = $region44
      $region43: #{tpu_custom_call.1} parent=5 // pred_region
        %s238 = ssub.s32 %s17, 2
        // Predicated region
        $region45: #{tpu_custom_call.1} parent=43 // pred_check
          %p239 = pneg %p98
        $region46: #{tpu_custom_call.1} parent=43 // pred_check_branch
          %241 = sbr.rel (%p239) target = $region48
        $region47: #{tpu_custom_call.1} parent=43 // pred_region
          %s242 = sand.u32 %s83, 1
          %s243 = scalar_lea.sflag [#allocation4], %s242
          %s244 = sand.u32 %s83, 1
          %s245 = smul.addr %s244, 8
          %s246 = scalar_lea.vmem [#allocation7], %s245
          %247 = dma.done %s243, 128
        $region48: #{tpu_custom_call.1} parent=43 // pred_fallthru
          _
      $region44: #{tpu_custom_call.1} parent=5 // pred_fallthru
        _
    $region6: #{tpu_custom_call.1} parent=1 // loop_footer
      %s21 = sadd.s32 1, %s17
    $region7: #{tpu_custom_call.1} parent=1 // loop_footer_branch
      %16 = sbr.rel target = $region3
    $region8: #{tpu_custom_call.1} parent=1 // loop_exit
      _
    %248 = vsyncpa [#allocation3], 1
    %s249 = scalar_lea.sflag [#allocation3], 1
    %250 = vsyncpa %s249, 1
    %251 = vsyncpa [#allocation6], 1
    %s252 = scalar_lea.sflag [#allocation6], 1
    %253 = vsyncpa %s252, 1
    %254 = vsyncpa [#allocation4], 1
    %s255 = scalar_lea.sflag [#allocation4], 1
    %256 = vsyncpa %s255, 1

</llo_original>
